<compile_context>
chip_gen: v7x
topology: tpu7x:2x2x1
jax: 0.10.0
libtpu: 0.0.40
codegen_flags: <defaults>
</compile_context>

<pallas_src>
import functools

import jax
import jax.numpy as jnp
from jax import lax
from jax.experimental import pallas as pl
from jax.experimental.pallas import tpu as pltpu


def _encoder_block_kernel(seed_ref, x_ref, w_ref, b_ref, out_ref, acc_ref, *,
                          do_rate: float, training: bool, n_total: int):
    """Computes one (TM, TN) output tile; grid axis 2 is the K reduction."""
    # Hoist every grid/scalar query to the top level (outside pl.when bodies) so
    # they are substituted before any cond-branch jaxpr is formed.
    i = pl.program_id(0)
    j = pl.program_id(1)
    k = pl.program_id(2)
    nk = pl.num_programs(2)
    seed = seed_ref[0]

    @pl.when(k == 0)
    def _init():
        acc_ref[...] = jnp.zeros_like(acc_ref)

    # bf16 operands, f32 accumulation on the MXU. W tile is (TN, TK) in the
    # original (out_dim, in_dim) layout -> contract on dim 1 (x @ W^T).
    x = x_ref[...].astype(jnp.bfloat16)                    # (TM, TK)
    w = w_ref[...].astype(jnp.bfloat16)                    # (TN, TK)
    acc_ref[...] += lax.dot_general(
        x, w,
        dimension_numbers=(((1,), (1,)), ((), ())),
        preferred_element_type=jnp.float32)

    @pl.when(k == nk - 1)
    def _finalize():
        y = acc_ref[...] + b_ref[...]                      # (TM, TN) + (1, TN)
        y = jnp.where(y > 0, y, 0.2 * y)                   # LeakyReLU(0.2)

        if training and do_rate > 0.0:
            # Inverted dropout, keep prob = 1 - p. Stateless hash of the global
            # element index xor seed -> pseudo-random 32-bit word per element.
            tm, tn = y.shape
            rows = lax.broadcasted_iota(jnp.int32, (tm, tn), 0) + i * tm
            cols = lax.broadcasted_iota(jnp.int32, (tm, tn), 1) + j * tn
            idx = (rows * n_total + cols).astype(jnp.uint32)
            h = idx ^ seed.astype(jnp.uint32)
            h = h ^ (h >> 16)
            h = h * jnp.uint32(0x7FEB352D)
            h = h ^ (h >> 15)
            h = h * jnp.uint32(0x846CA68B)
            h = h ^ (h >> 16)
            # Compare top 31 bits as signed int (avoids unsigned-compare path).
            thr31 = jnp.int32(min(int(round(do_rate * (2.0 ** 31))), 2 ** 31 - 1))
            keep = (h >> 1).astype(jnp.int32) >= thr31     # P(keep) = 1 - p
            scale = jnp.float32(1.0 / (1.0 - do_rate))
            y = jnp.where(keep, y * scale, jnp.float32(0.0))

        out_ref[...] = y.astype(out_ref.dtype)


def _pick_tile(dim: int, target: int) -> int:
    """Use the target tile if it divides the dim, else fall back to full dim."""
    return target if dim % target == 0 else dim


def encoder_block(x, weight, bias, seed, *, do_rate: float, training: bool = True,
                  tm: int = 256, tn: int = 512, tk: int = 512):
    """Forward pass of EncoderBlock.

    x:      (B, in_dim) float32
    weight: (out_dim, in_dim) float32   (PyTorch nn.Linear convention, NOT transposed)
    bias:   (out_dim,) float32
    seed:   int32 scalar for the dropout mask
    """
    B, in_dim = x.shape
    out_dim, in_dim_w = weight.shape
    assert in_dim == in_dim_w

    TM = _pick_tile(B, tm)
    TN = _pick_tile(out_dim, tn)
    TK = _pick_tile(in_dim, tk)
    grid = (B // TM, out_dim // TN, in_dim // TK)

    b2 = bias.reshape(1, out_dim).astype(jnp.float32)
    seed_arr = jnp.asarray([seed], dtype=jnp.int32)

    kernel = functools.partial(_encoder_block_kernel,
                               do_rate=float(do_rate),
                               training=bool(training),
                               n_total=int(out_dim))

    flops = 2 * B * in_dim * out_dim
    bytes_accessed = 4 * (B * in_dim + out_dim * in_dim + out_dim + B * out_dim)

    return pl.pallas_call(
        kernel,
        out_shape=jax.ShapeDtypeStruct((B, out_dim), jnp.float32),
        grid_spec=pltpu.PrefetchScalarGridSpec(
            num_scalar_prefetch=1,           # seed -> SMEM, passed to index_maps
            grid=grid,
            in_specs=[
                pl.BlockSpec((TM, TK), lambda i, j, k, s: (i, k)),   # x
                pl.BlockSpec((TN, TK), lambda i, j, k, s: (j, k)),   # W (out, in)
                pl.BlockSpec((1, TN), lambda i, j, k, s: (0, j)),    # bias row
            ],
            out_specs=pl.BlockSpec((TM, TN), lambda i, j, k, s: (i, j)),
            scratch_shapes=[pltpu.VMEM((TM, TN), jnp.float32)],
        ),
        compiler_params=pltpu.CompilerParams(
            dimension_semantics=("parallel", "parallel", "arbitrary")),
        cost_estimate=pl.CostEstimate(flops=flops, transcendentals=0,
                                      bytes_accessed=bytes_accessed),
    )(seed_arr, x, weight, b2)


if __name__ == "__main__":
    key = jax.random.PRNGKey(0)
    k_x, k_w, k_b = jax.random.split(key, 3)

    B, in_dim, out_dim = 8, 32, 128
    do_rate = 0.2

    x = jax.random.normal(k_x, (B, in_dim), dtype=jnp.float32)
    bound = 1.0 / jnp.sqrt(in_dim)
    weight = jax.random.uniform(k_w, (out_dim, in_dim),
                                minval=-bound, maxval=bound, dtype=jnp.float32)
    bias = jax.random.uniform(k_b, (out_dim,),
                              minval=-bound, maxval=bound, dtype=jnp.float32)

    # Eval mode (dropout = identity): check against the f32 reference.
    out_eval = jax.block_until_ready(
        encoder_block(x, weight, bias, seed=0, do_rate=do_rate, training=False))
    ref = x @ weight.T + bias
    ref = jnp.where(ref > 0, ref, 0.2 * ref)
    assert out_eval.shape == (B, out_dim)
    assert jnp.allclose(out_eval, ref, atol=3e-2, rtol=3e-2), \
        "eval-mode mismatch vs f32 reference (bf16 matmul tolerance)"

    # Training mode: dropout mask sanity checks.
    out_train = jax.block_until_ready(
        encoder_block(x, weight, bias, seed=1234, do_rate=do_rate, training=True))
    assert out_train.shape == (B, out_dim)
    kept = out_train != 0
    frac_dropped = 1.0 - float(jnp.mean(kept.astype(jnp.float32)))
    assert abs(frac_dropped - do_rate) < 0.15, \
        f"drop fraction {frac_dropped:.3f} far from p={do_rate}"
    scale = 1.0 / (1.0 - do_rate)
    assert jnp.allclose(jnp.where(kept, out_train, 0.0),
                        jnp.where(kept, out_eval * scale, 0.0),
                        atol=1e-4, rtol=1e-4), "train-mode kept values mismatch"

    print("KERNEL_OK")
</pallas_src>

<mosaic_0001>
module attributes {stable_mosaic.version = 11 : i64} {
  func.func @_encoder_block_kernel(%arg0: i32, %arg1: i32, %arg2: i32, %arg3: memref<1xi32, #tpu.memory_space<smem>>, %arg4: memref<8x32xf32, #tpu.memory_space<vmem>>, %arg5: memref<128x32xf32, #tpu.memory_space<vmem>>, %arg6: memref<1x128xf32, #tpu.memory_space<vmem>>, %arg7: memref<8x128xf32, #tpu.memory_space<vmem>>, %arg8: memref<8x128xf32, #tpu.memory_space<vmem>>) attributes {dimension_semantics = [#tpu.dimension_semantics<parallel>, #tpu.dimension_semantics<parallel>, #tpu.dimension_semantics<arbitrary>], iteration_bounds = array<i64: 1, 1, 1>, scalar_prefetch = 1 : i64, scratch_operands = 1 : i64, tpu.core_type = #tpu.core_type<tc>, window_params = [{transform_indices = @transform_0, window_bounds = array<i64: 8, 32>}, {transform_indices = @transform_1, window_bounds = array<i64: 128, 32>}, {transform_indices = @transform_2, window_bounds = array<i64: 1, 128>}, {transform_indices = @transform_3, window_bounds = array<i64: 8, 128>}]} {
    %c0_i32 = arith.constant 0 : i32
    %0 = arith.cmpi eq, %arg2, %c0_i32 : i32
    %1 = arith.extui %0 : i1 to i32
    %c0_i32_0 = arith.constant 0 : i32
    %2 = arith.cmpi ne, %1, %c0_i32_0 : i32
    scf.if %2 {
      %cst_10 = arith.constant 0.000000e+00 : f32
      %14 = vector.broadcast %cst_10 : f32 to vector<8x128xf32>
      %c0_11 = arith.constant 0 : index
      %c0_12 = arith.constant 0 : index
      %15 = vector.load %arg8[%c0_11, %c0_12] : memref<8x128xf32, #tpu.memory_space<vmem>>, vector<8x128xf32>
      tpu.vector_store %arg8[%c0_11, %c0_12], %14 {strides = array<i32>} : memref<8x128xf32, #tpu.memory_space<vmem>>, vector<8x128xf32>,
    } else {
    }
    %c0 = arith.constant 0 : index
    %c0_1 = arith.constant 0 : index
    %3 = vector.load %arg4[%c0, %c0_1] : memref<8x32xf32, #tpu.memory_space<vmem>>, vector<8x32xf32>
    %4 = arith.truncf %3 : vector<8x32xf32> to vector<8x32xbf16>
    %c0_2 = arith.constant 0 : index
    %c0_3 = arith.constant 0 : index
    %5 = vector.load %arg5[%c0_2, %c0_3] : memref<128x32xf32, #tpu.memory_space<vmem>>, vector<128x32xf32>
    %6 = arith.truncf %5 : vector<128x32xf32> to vector<128x32xbf16>
    %c0_4 = arith.constant 0 : index
    %c0_5 = arith.constant 0 : index
    %7 = vector.load %arg8[%c0_4, %c0_5] : memref<8x128xf32, #tpu.memory_space<vmem>>, vector<8x128xf32>
    %cst = arith.constant dense<0.000000e+00> : vector<8x128xf32>
    %8 = tpu.matmul %4, %6, %cst {dimension_numbers = #tpu.dot_dimension_numbers<[1], [1], [0], [0], [0, 0, 1, 0], [], []>} : vector<8x32xbf16>, vector<128x32xbf16>, vector<8x128xf32> -> vector<8x128xf32>
    %9 = arith.addf %7, %8 : vector<8x128xf32>
    %c0_6 = arith.constant 0 : index
    %c0_7 = arith.constant 0 : index
    %10 = vector.load %arg8[%c0_6, %c0_7] : memref<8x128xf32, #tpu.memory_space<vmem>>, vector<8x128xf32>
    tpu.vector_store %arg8[%c0_6, %c0_7], %9 {strides = array<i32>} : memref<8x128xf32, #tpu.memory_space<vmem>>, vector<8x128xf32>,
    %c0_i32_8 = arith.constant 0 : i32
    %11 = arith.cmpi eq, %arg2, %c0_i32_8 : i32
    %12 = arith.extui %11 : i1 to i32
    %c0_i32_9 = arith.constant 0 : i32
    %13 = arith.cmpi ne, %12, %c0_i32_9 : i32
    scf.if %13 {
      %c0_10 = arith.constant 0 : index
      %c0_11 = arith.constant 0 : index
      %14 = vector.load %arg8[%c0_10, %c0_11] : memref<8x128xf32, #tpu.memory_space<vmem>>, vector<8x128xf32>
      %c0_12 = arith.constant 0 : index
      %c0_13 = arith.constant 0 : index
      %15 = vector.load %arg6[%c0_12, %c0_13] : memref<1x128xf32, #tpu.memory_space<vmem>>, vector<1x128xf32>
      %16 = vector.broadcast %15 : vector<1x128xf32> to vector<8x128xf32>
      %17 = arith.addf %14, %16 : vector<8x128xf32>
      %cst_14 = arith.constant 0.000000e+00 : f32
      %18 = vector.broadcast %cst_14 : f32 to vector<8x128xf32>
      %19 = arith.cmpf ogt, %17, %18 : vector<8x128xf32>
      %cst_15 = arith.constant 2.000000e-01 : f32
      %20 = vector.broadcast %cst_15 : f32 to vector<8x128xf32>
      %21 = arith.mulf %20, %17 : vector<8x128xf32>
      %22 = arith.select %19, %17, %21 : vector<8x128xi1>, vector<8x128xf32>
      %c0_16 = arith.constant 0 : index
      %c0_17 = arith.constant 0 : index
      %23 = vector.load %arg7[%c0_16, %c0_17] : memref<8x128xf32, #tpu.memory_space<vmem>>, vector<8x128xf32>
      tpu.vector_store %arg7[%c0_16, %c0_17], %22 {strides = array<i32>} : memref<8x128xf32, #tpu.memory_space<vmem>>, vector<8x128xf32>,
    } else {
    }
    return
  }
  func.func @transform_0(%arg0: i32, %arg1: i32, %arg2: i32, %arg3: memref<1xi32, #tpu.memory_space<smem>>) -> (i32, i32) {
    %c0_i32 = arith.constant 0 : i32
    return %arg0, %arg2 : i32, i32
  }
  func.func @transform_1(%arg0: i32, %arg1: i32, %arg2: i32, %arg3: memref<1xi32, #tpu.memory_space<smem>>) -> (i32, i32) {
    %c0_i32 = arith.constant 0 : i32
    return %arg1, %arg2 : i32, i32
  }
  func.func @transform_2(%arg0: i32, %arg1: i32, %arg2: i32, %arg3: memref<1xi32, #tpu.memory_space<smem>>) -> (i32, i32) {
    %c0_i32 = arith.constant 0 : i32
    %c0_i32_0 = arith.constant 0 : i32
    return %c0_i32, %arg1 : i32, i32
  }
  func.func @transform_3(%arg0: i32, %arg1: i32, %arg2: i32, %arg3: memref<1xi32, #tpu.memory_space<smem>>) -> (i32, i32) {
    %c0_i32 = arith.constant 0 : i32
    return %arg0, %arg1 : i32, i32
  }
}

</mosaic_0001>

<llo_original>
// kernel: tpu_custom_call.1
$region0: #{tpu_custom_call.1}
  #allocation0 [shape = 'u32[]', space=smem, size = 0x4, offset = 0x4, fixed_abs, tag = 'smem constant byte address 0x4 - core index']
  #allocation1 [shape = 'u32[144,128]{1,0:T(1,128)}', space=vmem, size = 0x12000, scoped, tag = 'internal scratch']
  #allocation2 [shape = 'f32[8,128]{1,0:T(8,128)}', space=vmem, size = 0x1000, scoped, tag = 'scratch operand']
  #allocation3 [shape = 's32[1]{0}', space=sflag, size = 0x4, scoped, tag = 'scoped memory for tpu_custom_call.1']
  #allocation4 [shape = 's32[1]{0:T(128)S(6)}', space=smem, size = 0x200, scoped, tag = 'prefetched SMEM operand 0']
  %s0 = inlined_call_operand.<no memory space> [shape: s32[1], index: 0, kind: input, shape index: {}]
  %s1 = inlined_call_operand.vmem [shape: f32[8,32], index: 1, kind: input, shape index: {}]
  %s2 = inlined_call_operand.vmem [shape: f32[128,32], index: 2, kind: input, shape index: {}]
  %s3 = inlined_call_operand.vmem [shape: f32[1,128], index: 3, kind: input, shape index: {}]
  %s4 = inlined_call_operand.hbm [shape: f32[8,128], index: 4, kind: output, shape index: {}]
  %s5 = sld [smem:[#allocation0]]
  $region30: #{tpu_custom_call.1} parent=0
    _
  %s7 = ssub.s32 1, %s5
  %s8 = scalar_select 0, %s7, %s5
  %9 = sst [smem:[#allocation4]] %s0
  $region1: #{tpu_custom_call.1} parent=0
    #allocation5 [shape = 'u8[4096]{0}', space=vmem, size = 0x1000, scoped, tag = 'output window, operand 0, single buffered']
    #allocation6 [shape = 's32[1]{0}', space=sflag, size = 0x4, scoped, tag = 'scoped memory for tpu_custom_call.1']
    %10 = vsyncpa [#allocation6], 0
    // Predicated region
    $region2: #{tpu_custom_call.1} parent=1 // pred_check
      _
    $region3: #{tpu_custom_call.1} parent=1 // pred_check_branch
      %12 = sbr.rel (0) target = $region5
    $region4: #{tpu_custom_call.1} parent=1 // pred_region
      _
    $region5: #{tpu_custom_call.1} parent=1 // pred_fallthru
      _
    // Predicated region
    $region6: #{tpu_custom_call.1} parent=1 // pred_check
      _
    $region7: #{tpu_custom_call.1} parent=1 // pred_check_branch
      %14 = sbr.rel (0) target = $region9
    $region8: #{tpu_custom_call.1} parent=1 // pred_region
      _
    $region9: #{tpu_custom_call.1} parent=1 // pred_fallthru
      _
    // Predicated region
    $region10: #{tpu_custom_call.1} parent=1 // pred_check
      _
    $region11: #{tpu_custom_call.1} parent=1 // pred_check_branch
      %16 = sbr.rel (0) target = $region13
    $region12: #{tpu_custom_call.1} parent=1 // pred_region
      _
    $region13: #{tpu_custom_call.1} parent=1 // pred_fallthru
      _
    %p18 = scmp.eq.s32.totalorder 0, 0
    // Predicated region
    $region14: #{tpu_custom_call.1} parent=1 // pred_check
      %p19 = pneg %p18
    $region15: #{tpu_custom_call.1} parent=1 // pred_check_branch
      %21 = sbr.rel (%p19) target = $region17
    $region16: #{tpu_custom_call.1} parent=1 // pred_region
      %22 = vst [vmem:[#allocation2] sm:$0xff] 0.0
    $region17: #{tpu_custom_call.1} parent=1 // pred_fallthru
      _
    %v23 = vld [vmem:[%s1] sm:$0xff]
    %v24 = vpack.c.bf16 %v23, %v23
    %v25 = vld [vmem:[%s2] sm:$0xff]
    %v26 = vld [vmem:[%s2 + $0x8] sm:$0xff]
    %v27 = vld [vmem:[%s2 + $0x10] sm:$0xff]
    %v28 = vld [vmem:[%s2 + $0x18] sm:$0xff]
    %v29 = vld [vmem:[%s2 + $0x20] sm:$0xff]
    %v30 = vld [vmem:[%s2 + $0x28] sm:$0xff]
    %v31 = vld [vmem:[%s2 + $0x30] sm:$0xff]
    %v32 = vld [vmem:[%s2 + $0x38] sm:$0xff]
    %v33 = vld [vmem:[%s2 + $0x40] sm:$0xff]
    %v34 = vld [vmem:[%s2 + $0x48] sm:$0xff]
    %v35 = vld [vmem:[%s2 + $0x50] sm:$0xff]
    %v36 = vld [vmem:[%s2 + $0x58] sm:$0xff]
    %v37 = vld [vmem:[%s2 + $0x60] sm:$0xff]
    %v38 = vld [vmem:[%s2 + $0x68] sm:$0xff]
    %v39 = vld [vmem:[%s2 + $0x70] sm:$0xff]
    %v40 = vld [vmem:[%s2 + $0x78] sm:$0xff]
    %v41 = vpack.c.bf16 %v26, %v25
    %v42 = vpack.c.bf16 %v28, %v27
    %v43 = vpack.c.bf16 %v30, %v29
    %v44 = vpack.c.bf16 %v32, %v31
    %v45 = vpack.c.bf16 %v34, %v33
    %v46 = vpack.c.bf16 %v36, %v35
    %v47 = vpack.c.bf16 %v38, %v37
    %v48 = vpack.c.bf16 %v40, %v39
    %v49 = vld [vmem:[#allocation2] sm:$0xff]
    %vm50 = vcmask 261120
    %v52 = vsel %vm50, %v24, 0
    %v55 = vsel %vm50, %v41, 0
    %v58 = vsel %vm50, %v42, 0
    %v61 = vsel %vm50, %v43, 0
    %v64 = vsel %vm50, %v44, 0
    %v67 = vsel %vm50, %v45, 0
    %v70 = vsel %vm50, %v46, 0
    %v73 = vsel %vm50, %v47, 0
    %v76 = vsel %vm50, %v48, 0
    %78 = vmatprep.subr.bf16.mxu0 0
    %79 = vmatpush1.bf16.xpose.msra.mxu0 %v55
    %80 = vmatprep.subr.bf16.mxu0 0
    %81 = vmatpush1.bf16.xpose.msra.mxu0 %v58
    %82 = vmatprep.subr.bf16.mxu0 0
    %83 = vmatpush1.bf16.xpose.msra.mxu0 %v61
    %84 = vmatprep.subr.bf16.mxu0 0
    %85 = vmatpush1.bf16.xpose.msra.mxu0 %v64
    %86 = vmatprep.subr.bf16.mxu0 0
    %87 = vmatpush1.bf16.xpose.msra.mxu0 %v67
    %88 = vmatprep.subr.bf16.mxu0 0
    %89 = vmatpush1.bf16.xpose.msra.mxu0 %v70
    %90 = vmatprep.subr.bf16.mxu0 0
    %91 = vmatpush1.bf16.xpose.msra.mxu0 %v73
    %92 = vmatprep.subr.bf16.mxu0 0
    %93 = vmatpush1.bf16.xpose.msra.mxu0 %v76
    %94 = vmatprep.subr.bf16.mxu0 0
    %95 = vmatpush1.bf16.xpose.msra.mxu0 0
    %96 = vmatprep.subr.bf16.mxu0 0
    %97 = vmatpush1.bf16.xpose.msra.mxu0 0
    %98 = vmatprep.subr.bf16.mxu0 0
    %99 = vmatpush1.bf16.xpose.msra.mxu0 0
    %100 = vmatprep.subr.bf16.mxu0 0
    %101 = vmatpush1.bf16.xpose.msra.mxu0 0
    %102 = vmatprep.subr.bf16.mxu0 0
    %103 = vmatpush1.bf16.xpose.msra.mxu0 0
    %104 = vmatprep.subr.bf16.mxu0 0
    %105 = vmatpush1.bf16.xpose.msra.mxu0 0
    %106 = vmatprep.subr.bf16.mxu0 0
    %107 = vmatpush1.bf16.xpose.msra.mxu0 0
    %108 = vmatprep.subr.bf16.mxu0 0
    %109 = vmatpush1.bf16.xpose.msra.mxu0 0
    %110 = vmatprep.mubr.bf16.mxu0 0
    %111 = vmatmul.mubr.bf16.gmra.mrb[0].mxu0 %v52
    %v112 = vpop.f32.mrb[0].mxu0
    %v113 = vadd.f32 0.0, %v112
    %v114 = vpop.f32.mrb[0].mxu0
    %v115 = vpop.f32.mrb[0].mxu0
    %v116 = vpop.f32.mrb[0].mxu0
    %117 = vdwg.mxu0
    %v118 = vadd.f32 %v49, %v113
    %119 = vst [vmem:[#allocation2] sm:$0xff] %v118
    // Predicated region
    $region18: #{tpu_custom_call.1} parent=1 // pred_check
      %p120 = pneg %p18
    $region19: #{tpu_custom_call.1} parent=1 // pred_check_branch
      %122 = sbr.rel (%p120) target = $region21
    $region20: #{tpu_custom_call.1} parent=1 // pred_region
      %v123 = vld [vmem:[#allocation2] sm:$0xff]
      %v124 = vld [vmem:[%s3] sm:$0x1]
      %v126 = vlaneseq
      %v127 = vshrl.u32 %v126, 7
      %v128 = vsub.s32 0, %v127
      %v129 = vrot.slane %v124, %v128
      %v131 = vadd.f32 %v123, %v129
      %vm132 = vcmp.gt.f32.partialorder %v131, 0.0
      %v133 = vmul.f32 %v131, 0.2
      %v134 = vsel %vm132, %v131, %v133
      %135 = vst [vmem:[#allocation5] sm:$0xff] %v134
    $region21: #{tpu_custom_call.1} parent=1 // pred_fallthru
      _
    // Predicated region
    $region22: #{tpu_custom_call.1} parent=1 // pred_check
      _
    $region23: #{tpu_custom_call.1} parent=1 // pred_check_branch
      %137 = sbr.rel (0) target = $region25
    $region24: #{tpu_custom_call.1} parent=1 // pred_region
      %s139 = ssub.s32 128, 128
      %140 = vsyncadd [#allocation6], %s139
      %s142 = sshll.u32 [#allocation5], 4
      %s143 = int_to_ptr.vmem [resolvable:$true] %s142
      %145 = dma.vmem_to_hbm [thread:$0]  %s143, 128, %s4, [#allocation6]
    $region25: #{tpu_custom_call.1} parent=1 // pred_fallthru
      _
    // Predicated region
    $region26: #{tpu_custom_call.1} parent=1 // pred_check
      _
    $region27: #{tpu_custom_call.1} parent=1 // pred_check_branch
      %147 = sbr.rel (0) target = $region29
    $region28: #{tpu_custom_call.1} parent=1 // pred_region
      %148 = dma.done [#allocation6], 128
    $region29: #{tpu_custom_call.1} parent=1 // pred_fallthru
      _
    %149 = vsyncpa [#allocation6], 1

</llo_original>
